<compile_context>
chip_gen: v5e
topology: v5e:2x2
jax: 0.10.0
libtpu: 0.0.40
codegen_flags: <defaults>
</compile_context>

<pallas_src>
import jax
import jax.numpy as jnp
from jax.experimental import pallas as pl
from jax.experimental.pallas import tpu as pltpu

LANE = 128       # lane-dense padded width for every hidden/output layer
ROW_ALIGN = 16   # batch-tile row alignment (multiple of 8; 16 also covers bf16 packing)


def _round_up(x, m):
    return (x + m - 1) // m * m


def _skipnet_kernel(x_ref, ws_ref, wx_ref, b_ref, o_ref):
    """Fused skip-connected MLP forward for one batch tile.

    x_ref : (b_tile, in_size)                 states
    ws_ref: (in_size, n_layers*LANE)          all state-side weights, packed
    wx_ref: (n_rest, LANE, LANE)              hidden-side weights, stacked
    b_ref : (1, n_layers*LANE)                all biases, packed
    o_ref : (b_tile, LANE)                    padded output (lane-dense store)
    """
    s = x_ref[...]

    # One wide N = n_layers*128 matmul for every layer's state projection + bias.
    s_all = (jnp.dot(s, ws_ref[...], preferred_element_type=jnp.float32)
             + b_ref[...])                                   # (b_tile, n_layers*LANE)

    # Layer 0: relu(state @ W0 + b0)  -- just a static 128-lane slice of s_all.
    h = jnp.maximum(s_all[:, :LANE], 0.0)

    # Layers 1..L: relu(state @ ws_i + h @ wx_i + b_i); last layer has no activation.
    n_rest = wx_ref.shape[0]
    for i in range(n_rest):
        z = (s_all[:, (i + 1) * LANE:(i + 2) * LANE]
             + jnp.dot(h.astype(wx_ref.dtype), wx_ref[i],
                       preferred_element_type=jnp.float32))
        h = z if i == n_rest - 1 else jnp.maximum(z, 0.0)

    o_ref[...] = h                                           # full 128-lane vst


def skipnet_forward(states, packed_params, output_size, *,
                    b_tile=None, slice_cols=True):
    """states: [B, input_size] f32.  packed_params = (W_s_all, Wx_all, b_all).

    Returns [B, output_size] (or the [B, 128] padded slab when slice_cols=False,
    so a fused consumer avoids the extra HBM pass of the column slice).
    """
    ws_all, wx_all, b_all = packed_params
    B, in_size = states.shape
    n_layers = ws_all.shape[1] // LANE
    n_rest = wx_all.shape[0]

    # bf16 weight path: stream states in bf16 too (halves the dominant DMA bytes).
    if ws_all.dtype == jnp.bfloat16:
        states = states.astype(jnp.bfloat16)

    if b_tile is None:
        # Small batches: single tile.  Large batches: 512-row tiles (~85% of HBM
        # roofline per measured tile-size data; footprint is still only ~1-2 MiB
        # with double buffering, far under even v7x's 64 MiB VMEM).
        b_tile = min(_round_up(B, ROW_ALIGN), 512)
    Bp = _round_up(B, b_tile)
    if Bp != B:
        states = jnp.pad(states, ((0, Bp - B), (0, 0)))

    grid = (Bp // b_tile,)

    in_specs = [
        pl.BlockSpec((b_tile, in_size), lambda i: (i, 0)),          # streamed states
        pl.BlockSpec(ws_all.shape, lambda i: (0, 0)),               # resident weights
        pl.BlockSpec(wx_all.shape, lambda i: (0, 0, 0)),
        pl.BlockSpec(b_all.shape, lambda i: (0, 0)),
    ]
    out_spec = pl.BlockSpec((b_tile, LANE), lambda i: (i, 0))

    # Advisory cost estimate for the XLA scheduler.
    flops = 2 * Bp * in_size * (n_layers * LANE) + 2 * Bp * n_rest * LANE * LANE
    bytes_accessed = (states.size * states.dtype.itemsize
                      + int(ws_all.size) * ws_all.dtype.itemsize
                      + int(wx_all.size) * wx_all.dtype.itemsize
                      + int(b_all.size) * b_all.dtype.itemsize
                      + Bp * LANE * 4)

    out = pl.pallas_call(
        _skipnet_kernel,
        out_shape=jax.ShapeDtypeStruct((Bp, LANE), jnp.float32),
        grid=grid,
        in_specs=in_specs,
        out_specs=out_spec,
        compiler_params=pltpu.CompilerParams(
            dimension_semantics=("parallel",)),
        cost_estimate=pl.CostEstimate(flops=int(flops), transcendentals=0,
                                      bytes_accessed=int(bytes_accessed)),
    )(states, ws_all, wx_all, b_all)

    if Bp != B:
        out = out[:B]
    if slice_cols:
        out = out[:, :output_size]
    return out


def init_params(key, input_size, output_size, hidden=(32, 16, 8)):
    """Deterministic init mirroring the PyTorch module.

    Hidden-layer weights ~ U(-1/sqrt(out_features), 1/sqrt(out_features)) (hidden_init),
    final weight ~ U(-0.003, 0.003); biases keep the PyTorch-default
    U(-1/sqrt(fan_in), 1/sqrt(fan_in)).  Weights stored as [in, out] with the
    [state, x] concatenation still fused in w.
    """
    keys = jax.random.split(key, 2 * (len(hidden) + 1))
    raw = []

    # layer 0: Linear(input_size, hidden[0])
    lim_w = 1.0 / float(jnp.sqrt(hidden[0]))
    lim_b = 1.0 / float(jnp.sqrt(input_size))
    w0 = jax.random.uniform(keys[0], (input_size, hidden[0]), jnp.float32, -lim_w, lim_w)
    b0 = jax.random.uniform(keys[1], (1, hidden[0]), jnp.float32, -lim_b, lim_b)
    raw.append((w0, b0))

    # layers 1..L-1: Linear(hidden[i-1] + input_size, hidden[i])
    for i in range(1, len(hidden)):
        fan_in = hidden[i - 1] + input_size
        lim_w = 1.0 / float(jnp.sqrt(hidden[i]))
        lim_b = 1.0 / float(jnp.sqrt(fan_in))
        w = jax.random.uniform(keys[2 * i], (fan_in, hidden[i]), jnp.float32, -lim_w, lim_w)
        b = jax.random.uniform(keys[2 * i + 1], (1, hidden[i]), jnp.float32, -lim_b, lim_b)
        raw.append((w, b))

    # output layer: Linear(hidden[-1] + input_size, output_size)
    fan_in = hidden[-1] + input_size
    lim_b = 1.0 / float(jnp.sqrt(fan_in))
    w = jax.random.uniform(keys[-2], (fan_in, output_size), jnp.float32, -0.003, 0.003)
    b = jax.random.uniform(keys[-1], (1, output_size), jnp.float32, -lim_b, lim_b)
    raw.append((w, b))
    return raw


def pack_params(raw, input_size, dtype=jnp.float32):
    """Pack parameters into 3 lane-dense kernel inputs.

    W_s_all : (input_size, n_layers*128)  -- all state-side weights, one per 128-lane slot
    Wx_all  : (n_layers-1, 128, 128)      -- hidden-side weights (K and N zero-padded)
    b_all   : (1, n_layers*128)           -- all biases

    Zero-padded columns + relu(0)=0 keep padded lanes exactly zero, so the math
    is exact.  Use dtype=jnp.bfloat16 for the large-batch MXU/DMA win (f32 accumulate).
    """
    n_layers = len(raw)
    n_rest = n_layers - 1
    ws_all = jnp.zeros((input_size, n_layers * LANE), jnp.float32)
    b_all = jnp.zeros((1, n_layers * LANE), jnp.float32)
    wx_all = jnp.zeros((n_rest, LANE, LANE), jnp.float32)

    w0, b0 = raw[0]
    ws_all = ws_all.at[:, :w0.shape[1]].set(w0)
    b_all = b_all.at[:, :b0.shape[1]].set(b0)

    for i, (w, b) in enumerate(raw[1:]):
        ws = w[:input_size]          # rows multiplying the raw state
        wx = w[input_size:]          # rows multiplying the previous hidden activation
        col0 = (i + 1) * LANE
        ws_all = ws_all.at[:, col0:col0 + ws.shape[1]].set(ws)
        b_all = b_all.at[:, col0:col0 + b.shape[1]].set(b)
        wx_all = wx_all.at[i, :wx.shape[0], :wx.shape[1]].set(wx)

    # biases stay f32 (added in the f32 accumulator; v5e has no bf16 VPU anyway).
    return ws_all.astype(dtype), wx_all.astype(dtype), b_all


def _reference_forward(states, raw):
    """Pure-JAX mirror of the PyTorch forward (with explicit concatenation)."""
    w0, b0 = raw[0]
    x = jnp.maximum(states @ w0 + b0, 0.0)
    for (w, b) in raw[1:-1]:
        x = jnp.maximum(jnp.concatenate([states, x], axis=1) @ w + b, 0.0)
    w, b = raw[-1]
    return jnp.concatenate([states, x], axis=1) @ w + b


if __name__ == "__main__":
    batch, input_size, output_size = 8, 32, 4
    hidden = (32, 16, 8)

    key = jax.random.PRNGKey(0)
    pkey, xkey = jax.random.split(key)
    raw_params = init_params(pkey, input_size, output_size, hidden)
    packed_params = pack_params(raw_params, input_size)          # f32 (bit-tight check)
    states = jax.random.normal(xkey, (batch, input_size), jnp.float32)

    out = skipnet_forward(states, packed_params, output_size)
    out = jax.block_until_ready(out)

    ref = _reference_forward(states, raw_params)
    assert out.shape == (batch, output_size)
    assert jnp.allclose(out, ref, atol=1e-5, rtol=1e-5), "mismatch vs JAX reference"
    print("KERNEL_OK")
</pallas_src>

<mosaic_0001>
module attributes {stable_mosaic.version = 11 : i64} {
  func.func @_skipnet_kernel(%arg0: i32, %arg1: memref<16x32xf32, #tpu.memory_space<vmem>>, %arg2: memref<32x512xf32, #tpu.memory_space<vmem>>, %arg3: memref<3x128x128xf32, #tpu.memory_space<vmem>>, %arg4: memref<1x512xf32, #tpu.memory_space<vmem>>, %arg5: memref<16x128xf32, #tpu.memory_space<vmem>>) attributes {dimension_semantics = [#tpu.dimension_semantics<parallel>], iteration_bounds = array<i64: 1>, scalar_prefetch = 0 : i64, scratch_operands = 0 : i64, tpu.core_type = #tpu.core_type<tc>, window_params = [{transform_indices = @transform_0, window_bounds = array<i64: 16, 32>}, {pipeline_mode = #tpu.pipeline_mode<synchronous>, transform_indices = @transform_1, window_bounds = array<i64: 32, 512>}, {pipeline_mode = #tpu.pipeline_mode<synchronous>, transform_indices = @transform_2, window_bounds = array<i64: 3, 128, 128>}, {pipeline_mode = #tpu.pipeline_mode<synchronous>, transform_indices = @transform_3, window_bounds = array<i64: 1, 512>}, {transform_indices = @transform_4, window_bounds = array<i64: 16, 128>}]} {
    %c0 = arith.constant 0 : index
    %c0_0 = arith.constant 0 : index
    %0 = vector.load %arg1[%c0, %c0_0] : memref<16x32xf32, #tpu.memory_space<vmem>>, vector<16x32xf32>
    %c0_1 = arith.constant 0 : index
    %c0_2 = arith.constant 0 : index
    %1 = vector.load %arg2[%c0_1, %c0_2] : memref<32x512xf32, #tpu.memory_space<vmem>>, vector<32x512xf32>
    %cst = arith.constant dense<0.000000e+00> : vector<16x512xf32>
    %2 = tpu.matmul %0, %1, %cst {dimension_numbers = #tpu.dot_dimension_numbers<[1], [0], [0], [1], [0, 0, 1, 1], [], []>} : vector<16x32xf32>, vector<32x512xf32>, vector<16x512xf32> -> vector<16x512xf32>
    %c0_3 = arith.constant 0 : index
    %c0_4 = arith.constant 0 : index
    %3 = vector.load %arg4[%c0_3, %c0_4] : memref<1x512xf32, #tpu.memory_space<vmem>>, vector<1x512xf32>
    %4 = vector.broadcast %3 : vector<1x512xf32> to vector<16x512xf32>
    %5 = arith.addf %2, %4 : vector<16x512xf32>
    %6 = vector.extract_strided_slice %5 {offsets = [0, 0], sizes = [16, 128], strides = [1, 1]} : vector<16x512xf32> to vector<16x128xf32>
    %cst_5 = arith.constant 0.000000e+00 : f32
    %7 = vector.broadcast %cst_5 : f32 to vector<16x128xf32>
    %8 = arith.maximumf %6, %7 : vector<16x128xf32>
    %9 = vector.extract_strided_slice %5 {offsets = [0, 128], sizes = [16, 128], strides = [1, 1]} : vector<16x512xf32> to vector<16x128xf32>
    %c0_6 = arith.constant 0 : index
    %c0_7 = arith.constant 0 : index
    %c0_8 = arith.constant 0 : index
    %10 = vector.load %arg3[%c0_6, %c0_7, %c0_8] : memref<3x128x128xf32, #tpu.memory_space<vmem>>, vector<1x128x128xf32>
    %11 = vector.shape_cast %10 : vector<1x128x128xf32> to vector<128x128xf32>
    %cst_9 = arith.constant dense<0.000000e+00> : vector<16x128xf32>
    %12 = tpu.matmul %8, %11, %cst_9 {dimension_numbers = #tpu.dot_dimension_numbers<[1], [0], [0], [1], [0, 0, 1, 1], [], []>} : vector<16x128xf32>, vector<128x128xf32>, vector<16x128xf32> -> vector<16x128xf32>
    %13 = arith.addf %9, %12 : vector<16x128xf32>
    %cst_10 = arith.constant 0.000000e+00 : f32
    %14 = vector.broadcast %cst_10 : f32 to vector<16x128xf32>
    %15 = arith.maximumf %13, %14 : vector<16x128xf32>
    %16 = vector.extract_strided_slice %5 {offsets = [0, 256], sizes = [16, 128], strides = [1, 1]} : vector<16x512xf32> to vector<16x128xf32>
    %c1 = arith.constant 1 : index
    %c0_11 = arith.constant 0 : index
    %c0_12 = arith.constant 0 : index
    %17 = vector.load %arg3[%c1, %c0_11, %c0_12] : memref<3x128x128xf32, #tpu.memory_space<vmem>>, vector<1x128x128xf32>
    %18 = vector.shape_cast %17 : vector<1x128x128xf32> to vector<128x128xf32>
    %cst_13 = arith.constant dense<0.000000e+00> : vector<16x128xf32>
    %19 = tpu.matmul %15, %18, %cst_13 {dimension_numbers = #tpu.dot_dimension_numbers<[1], [0], [0], [1], [0, 0, 1, 1], [], []>} : vector<16x128xf32>, vector<128x128xf32>, vector<16x128xf32> -> vector<16x128xf32>
    %20 = arith.addf %16, %19 : vector<16x128xf32>
    %cst_14 = arith.constant 0.000000e+00 : f32
    %21 = vector.broadcast %cst_14 : f32 to vector<16x128xf32>
    %22 = arith.maximumf %20, %21 : vector<16x128xf32>
    %23 = vector.extract_strided_slice %5 {offsets = [0, 384], sizes = [16, 128], strides = [1, 1]} : vector<16x512xf32> to vector<16x128xf32>
    %c2 = arith.constant 2 : index
    %c0_15 = arith.constant 0 : index
    %c0_16 = arith.constant 0 : index
    %24 = vector.load %arg3[%c2, %c0_15, %c0_16] : memref<3x128x128xf32, #tpu.memory_space<vmem>>, vector<1x128x128xf32>
    %25 = vector.shape_cast %24 : vector<1x128x128xf32> to vector<128x128xf32>
    %cst_17 = arith.constant dense<0.000000e+00> : vector<16x128xf32>
    %26 = tpu.matmul %22, %25, %cst_17 {dimension_numbers = #tpu.dot_dimension_numbers<[1], [0], [0], [1], [0, 0, 1, 1], [], []>} : vector<16x128xf32>, vector<128x128xf32>, vector<16x128xf32> -> vector<16x128xf32>
    %27 = arith.addf %23, %26 : vector<16x128xf32>
    %c0_18 = arith.constant 0 : index
    %c0_19 = arith.constant 0 : index
    %28 = vector.load %arg5[%c0_18, %c0_19] : memref<16x128xf32, #tpu.memory_space<vmem>>, vector<16x128xf32>
    tpu.vector_store %arg5[%c0_18, %c0_19], %27 {strides = array<i32>} : memref<16x128xf32, #tpu.memory_space<vmem>>, vector<16x128xf32>,
    return
  }
  func.func @transform_0(%arg0: i32) -> (i32, i32) {
    %c0_i32 = arith.constant 0 : i32
    %c0_i32_0 = arith.constant 0 : i32
    return %arg0, %c0_i32 : i32, i32
  }
  func.func @transform_1(%arg0: i32) -> (i32, i32) {
    %c0_i32 = arith.constant 0 : i32
    %c0_i32_0 = arith.constant 0 : i32
    %c0_i32_1 = arith.constant 0 : i32
    return %c0_i32, %c0_i32_0 : i32, i32
  }
  func.func @transform_2(%arg0: i32) -> (i32, i32, i32) {
    %c0_i32 = arith.constant 0 : i32
    %c0_i32_0 = arith.constant 0 : i32
    %c0_i32_1 = arith.constant 0 : i32
    %c0_i32_2 = arith.constant 0 : i32
    return %c0_i32, %c0_i32_0, %c0_i32_1 : i32, i32, i32
  }
  func.func @transform_3(%arg0: i32) -> (i32, i32) {
    %c0_i32 = arith.constant 0 : i32
    %c0_i32_0 = arith.constant 0 : i32
    %c0_i32_1 = arith.constant 0 : i32
    return %c0_i32, %c0_i32_0 : i32, i32
  }
  func.func @transform_4(%arg0: i32) -> (i32, i32) {
    %c0_i32 = arith.constant 0 : i32
    %c0_i32_0 = arith.constant 0 : i32
    return %arg0, %c0_i32 : i32, i32
  }
}

</mosaic_0001>

<llo_original>
// kernel: tpu_custom_call.1
$region0: #{tpu_custom_call.1}
  #allocation0 [shape = 'u32[]', space=smem, size = 0x4, offset = 0x4, fixed_abs, tag = 'smem constant byte address 0x4 - core index']
  #allocation1 [shape = 'u32[72,128]{1,0:T(1,128)}', space=vmem, size = 0x9000, scoped, tag = 'internal scratch']
  %s0 = inlined_call_operand.hbm [shape: f32[16,32], index: 0, kind: input, shape index: {}]
  %s1 = inlined_call_operand.hbm [shape: f32[32,512], index: 1, kind: input, shape index: {}]
  %s2 = inlined_call_operand.hbm [shape: f32[3,128,128], index: 2, kind: input, shape index: {}]
  %s3 = inlined_call_operand.hbm [shape: f32[1,512], index: 3, kind: input, shape index: {}]
  %s4 = inlined_call_operand.hbm [shape: f32[16,128], index: 4, kind: output, shape index: {}]
  %s5 = sld [smem:[#allocation0]]
  $region42: #{tpu_custom_call.1} parent=0
    _
  %s7 = ssub.s32 1, %s5
  %s8 = scalar_select 0, %s7, %s5
  $region1: #{tpu_custom_call.1} parent=0
    #allocation2 [shape = 'u8[8192]{0}', space=vmem, size = 0x2000, scoped, tag = 'input window, operand 0, single buffered']
    #allocation3 [shape = 's32[1]{0}', space=sflag, size = 0x4, scoped, tag = 'scoped memory for tpu_custom_call.1']
    #allocation4 [shape = 's32[1]{0}', space=sflag, size = 0x4, scoped, tag = 'scoped memory for tpu_custom_call.1']
    #allocation5 [shape = 'u8[65536]{0}', space=vmem, size = 0x10000, scoped, tag = 'input window, operand 1, single buffered']
    #allocation6 [shape = 's32[1]{0}', space=sflag, size = 0x4, scoped, tag = 'scoped memory for tpu_custom_call.1']
    #allocation7 [shape = 'u8[196608]{0}', space=vmem, size = 0x30000, scoped, tag = 'input window, operand 2, single buffered']
    #allocation8 [shape = 'u8[2048]{0}', space=vmem, size = 0x800, scoped, tag = 'input window, operand 3, single buffered']
    #allocation9 [shape = 's32[1]{0}', space=sflag, size = 0x4, scoped, tag = 'scoped memory for tpu_custom_call.1']
    #allocation10 [shape = 'u8[8192]{0}', space=vmem, size = 0x2000, scoped, tag = 'output window, operand 0, single buffered']
    %9 = vsyncpa [#allocation3], 0
    %10 = vsyncpa [#allocation6], 0
    %11 = vsyncpa [#allocation9], 0
    %12 = vsyncpa [#allocation4], 0
    // Predicated region
    $region2: #{tpu_custom_call.1} parent=1 // pred_check
      _
    $region3: #{tpu_custom_call.1} parent=1 // pred_check_branch
      %14 = sbr.rel (0) target = $region5
    $region4: #{tpu_custom_call.1} parent=1 // pred_region
      %16 = vsyncadd [#allocation3], 0
      %s17 = sshll.u32 %s0, 4
      %s18 = int_to_ptr.hbm [resolvable:$true] %s17
      %s19 = sshll.u32 [#allocation2], 4
      %s20 = int_to_ptr.vmem [resolvable:$true] %s19
      %25 = dma.hbm_to_vmem [thread:$0]  %s18, 256, %s20, [#allocation3], 128, 128, 8
    $region5: #{tpu_custom_call.1} parent=1 // pred_fallthru
      _
    // Predicated region
    $region6: #{tpu_custom_call.1} parent=1 // pred_check
      _
    $region7: #{tpu_custom_call.1} parent=1 // pred_check_branch
      %27 = sbr.rel (0) target = $region9
    $region8: #{tpu_custom_call.1} parent=1 // pred_region
      %29 = vsyncadd [#allocation6], 0
      %s30 = sshll.u32 %s1, 4
      %s31 = int_to_ptr.hbm [resolvable:$true] %s30
      %s32 = sshll.u32 [#allocation5], 4
      %s33 = int_to_ptr.vmem [resolvable:$true] %s32
      %38 = dma.hbm_to_vmem [thread:$0]  %s31, 2048, %s33, [#allocation6], 512, 512, 32
    $region9: #{tpu_custom_call.1} parent=1 // pred_fallthru
      _
    // Predicated region
    $region10: #{tpu_custom_call.1} parent=1 // pred_check
      _
    $region11: #{tpu_custom_call.1} parent=1 // pred_check_branch
      %40 = sbr.rel (0) target = $region13
    $region12: #{tpu_custom_call.1} parent=1 // pred_region
      %42 = vsyncadd [#allocation6], 0
      %s43 = sshll.u32 %s2, 4
      %s44 = int_to_ptr.hbm [resolvable:$true] %s43
      %s45 = sshll.u32 [#allocation7], 4
      %s46 = int_to_ptr.vmem [resolvable:$true] %s45
      %51 = dma.hbm_to_vmem [thread:$0]  %s44, 6144, %s46, [#allocation6], 128, 128, 8
    $region13: #{tpu_custom_call.1} parent=1 // pred_fallthru
      _
    // Predicated region
    $region14: #{tpu_custom_call.1} parent=1 // pred_check
      _
    $region15: #{tpu_custom_call.1} parent=1 // pred_check_branch
      %53 = sbr.rel (0) target = $region17
    $region16: #{tpu_custom_call.1} parent=1 // pred_region
      %55 = vsyncadd [#allocation9], 0
      %s57 = sshll.u32 %s3, 4
      %s58 = int_to_ptr.hbm [resolvable:$true] %s57
      %s59 = sshll.u32 [#allocation8], 4
      %s60 = int_to_ptr.vmem [resolvable:$true] %s59
      %62 = dma.hbm_to_vmem [thread:$0]  %s58, 64, %s60, [#allocation9]
    $region17: #{tpu_custom_call.1} parent=1 // pred_fallthru
      _
    // Predicated region
    $region18: #{tpu_custom_call.1} parent=1 // pred_check
      _
    $region19: #{tpu_custom_call.1} parent=1 // pred_check_branch
      %64 = sbr.rel (0) target = $region21
    $region20: #{tpu_custom_call.1} parent=1 // pred_region
      %66 = dma.done [#allocation3], 256
    $region21: #{tpu_custom_call.1} parent=1 // pred_fallthru
      _
    // Predicated region
    $region22: #{tpu_custom_call.1} parent=1 // pred_check
      _
    $region23: #{tpu_custom_call.1} parent=1 // pred_check_branch
      %68 = sbr.rel (0) target = $region25
    $region24: #{tpu_custom_call.1} parent=1 // pred_region
      %70 = dma.done [#allocation6], 2048
    $region25: #{tpu_custom_call.1} parent=1 // pred_fallthru
      _
    // Predicated region
    $region26: #{tpu_custom_call.1} parent=1 // pred_check
      _
    $region27: #{tpu_custom_call.1} parent=1 // pred_check_branch
      %72 = sbr.rel (0) target = $region29
    $region28: #{tpu_custom_call.1} parent=1 // pred_region
      %74 = dma.done [#allocation6], 6144
    $region29: #{tpu_custom_call.1} parent=1 // pred_fallthru
      _
    // Predicated region
    $region30: #{tpu_custom_call.1} parent=1 // pred_check
      _
    $region31: #{tpu_custom_call.1} parent=1 // pred_check_branch
      %76 = sbr.rel (0) target = $region33
    $region32: #{tpu_custom_call.1} parent=1 // pred_region
      %78 = dma.done [#allocation9], 64
    $region33: #{tpu_custom_call.1} parent=1 // pred_fallthru
      _
    %v79 = vld [vmem:[#allocation2] sm:$0xff]
    %v80 = vld [vmem:[#allocation2 + $0x8] sm:$0xff]
    %v81 = vld [vmem:[#allocation5] sm:$0xff]
    %v82 = vld [vmem:[#allocation5 + $0x8] sm:$0xff]
    %v83 = vld [vmem:[#allocation5 + $0x10] sm:$0xff]
    %v84 = vld [vmem:[#allocation5 + $0x18] sm:$0xff]
    %v85 = vld [vmem:[#allocation5 + $0x20] sm:$0xff]
    %v86 = vld [vmem:[#allocation5 + $0x28] sm:$0xff]
    %v87 = vld [vmem:[#allocation5 + $0x30] sm:$0xff]
    %v88 = vld [vmem:[#allocation5 + $0x38] sm:$0xff]
    %v89 = vld [vmem:[#allocation5 + $0x40] sm:$0xff]
    %v90 = vld [vmem:[#allocation5 + $0x48] sm:$0xff]
    %v91 = vld [vmem:[#allocation5 + $0x50] sm:$0xff]
    %v92 = vld [vmem:[#allocation5 + $0x58] sm:$0xff]
    %v93 = vld [vmem:[#allocation5 + $0x60] sm:$0xff]
    %v94 = vld [vmem:[#allocation5 + $0x68] sm:$0xff]
    %v95 = vld [vmem:[#allocation5 + $0x70] sm:$0xff]
    %v96 = vld [vmem:[#allocation5 + $0x78] sm:$0xff]
    %v97 = vld [vmem:[#allocation8] sm:$0xf]
    %v99 = vperm.slane %v97, 0
    %v100 = vperm.slane %v97, 1
    %v101 = vperm.slane %v97, 2
    %v102 = vperm.slane %v97, 3
    %vm107 = vcmask 261120
    %v109 = vsel %vm107, %v79, 0
    %v112 = vsel %vm107, %v80, 0
    %114 = vmatpush.msra.mxu0 0.0
    %115 = vmatpush.msra.mxu0 0.0
    %116 = vmatpush.msra.mxu0 0.0
    %117 = vmatpush.msra.mxu0 0.0
    %118 = vmatpush.msra.mxu0 0.0
    %119 = vmatpush.msra.mxu0 0.0
    %120 = vmatpush.msra.mxu0 0.0
    %121 = vmatpush.msra.mxu0 0.0
    %122 = vmatpush.msra.mxu0 0.0
    %123 = vmatpush.msra.mxu0 0.0
    %124 = vmatpush.msra.mxu0 0.0
    %125 = vmatpush.msra.mxu0 0.0
    %126 = vmatpush.msra.mxu0 %v93
    %127 = vmatpush.msra.mxu0 %v89
    %128 = vmatpush.msra.mxu0 %v85
    %129 = vmatpush.msra.mxu0 %v81
    %130 = vmatmul.f32.gmra.mxu0 %v109
    %v131 = vpop.f32.mrf.mxu0
    %v132 = vadd.f32 %v99, %v131
    %133 = vmatmul.f32.gmra.mxu0 %v112
    %v134 = vpop.f32.mrf.mxu0
    %v135 = vadd.f32 %v99, %v134
    %136 = vdwg.mxu0
    %137 = vmatpush.msra.mxu0 0.0
    %138 = vmatpush.msra.mxu0 0.0
    %139 = vmatpush.msra.mxu0 0.0
    %140 = vmatpush.msra.mxu0 0.0
    %141 = vmatpush.msra.mxu0 0.0
    %142 = vmatpush.msra.mxu0 0.0
    %143 = vmatpush.msra.mxu0 0.0
    %144 = vmatpush.msra.mxu0 0.0
    %145 = vmatpush.msra.mxu0 0.0
    %146 = vmatpush.msra.mxu0 0.0
    %147 = vmatpush.msra.mxu0 0.0
    %148 = vmatpush.msra.mxu0 0.0
    %149 = vmatpush.msra.mxu0 %v94
    %150 = vmatpush.msra.mxu0 %v90
    %151 = vmatpush.msra.mxu0 %v86
    %152 = vmatpush.msra.mxu0 %v82
    %153 = vmatmul.f32.gmra.mxu0 %v109
    %v154 = vpop.f32.mrf.mxu0
    %v155 = vadd.f32 %v100, %v154
    %156 = vmatmul.f32.gmra.mxu0 %v112
    %v157 = vpop.f32.mrf.mxu0
    %v158 = vadd.f32 %v100, %v157
    %159 = vdwg.mxu0
    %160 = vmatpush.msra.mxu0 0.0
    %161 = vmatpush.msra.mxu0 0.0
    %162 = vmatpush.msra.mxu0 0.0
    %163 = vmatpush.msra.mxu0 0.0
    %164 = vmatpush.msra.mxu0 0.0
    %165 = vmatpush.msra.mxu0 0.0
    %166 = vmatpush.msra.mxu0 0.0
    %167 = vmatpush.msra.mxu0 0.0
    %168 = vmatpush.msra.mxu0 0.0
    %169 = vmatpush.msra.mxu0 0.0
    %170 = vmatpush.msra.mxu0 0.0
    %171 = vmatpush.msra.mxu0 0.0
    %172 = vmatpush.msra.mxu0 %v95
    %173 = vmatpush.msra.mxu0 %v91
    %174 = vmatpush.msra.mxu0 %v87
    %175 = vmatpush.msra.mxu0 %v83
    %176 = vmatmul.f32.gmra.mxu0 %v109
    %v177 = vpop.f32.mrf.mxu0
    %v178 = vadd.f32 %v101, %v177
    %179 = vmatmul.f32.gmra.mxu0 %v112
    %v180 = vpop.f32.mrf.mxu0
    %v181 = vadd.f32 %v101, %v180
    %182 = vdwg.mxu0
    %183 = vmatpush.msra.mxu0 0.0
    %184 = vmatpush.msra.mxu0 0.0
    %185 = vmatpush.msra.mxu0 0.0
    %186 = vmatpush.msra.mxu0 0.0
    %187 = vmatpush.msra.mxu0 0.0
    %188 = vmatpush.msra.mxu0 0.0
    %189 = vmatpush.msra.mxu0 0.0
    %190 = vmatpush.msra.mxu0 0.0
    %191 = vmatpush.msra.mxu0 0.0
    %192 = vmatpush.msra.mxu0 0.0
    %193 = vmatpush.msra.mxu0 0.0
    %194 = vmatpush.msra.mxu0 0.0
    %195 = vmatpush.msra.mxu0 %v96
    %196 = vmatpush.msra.mxu0 %v92
    %197 = vmatpush.msra.mxu0 %v88
    %198 = vmatpush.msra.mxu0 %v84
    %199 = vmatmul.f32.gmra.mxu0 %v109
    %v200 = vpop.f32.mrf.mxu0
    %v201 = vadd.f32 %v102, %v200
    %202 = vmatmul.f32.gmra.mxu0 %v112
    %v203 = vpop.f32.mrf.mxu0
    %v204 = vadd.f32 %v102, %v203
    %205 = vdwg.mxu0
    %v206 = vmax.f32 %v132, 0.0
    %v207 = vmax.f32 %v135, 0.0
    %v208 = vld [vmem:[#allocation7] sm:$0xff]
    %v209 = vld [vmem:[#allocation7 + $0x8] sm:$0xff]
    %v210 = vld [vmem:[#allocation7 + $0x10] sm:$0xff]
    %v211 = vld [vmem:[#allocation7 + $0x18] sm:$0xff]
    %v212 = vld [vmem:[#allocation7 + $0x20] sm:$0xff]
    %v213 = vld [vmem:[#allocation7 + $0x28] sm:$0xff]
    %v214 = vld [vmem:[#allocation7 + $0x30] sm:$0xff]
    %v215 = vld [vmem:[#allocation7 + $0x38] sm:$0xff]
    %v216 = vld [vmem:[#allocation7 + $0x40] sm:$0xff]
    %v217 = vld [vmem:[#allocation7 + $0x48] sm:$0xff]
    %v218 = vld [vmem:[#allocation7 + $0x50] sm:$0xff]
    %v219 = vld [vmem:[#allocation7 + $0x58] sm:$0xff]
    %v220 = vld [vmem:[#allocation7 + $0x60] sm:$0xff]
    %v221 = vld [vmem:[#allocation7 + $0x68] sm:$0xff]
    %v222 = vld [vmem:[#allocation7 + $0x70] sm:$0xff]
    %v223 = vld [vmem:[#allocation7 + $0x78] sm:$0xff]
    %224 = vmatpush.msra.mxu0 %v223
    %225 = vmatpush.msra.mxu0 %v222
    %226 = vmatpush.msra.mxu0 %v221
    %227 = vmatpush.msra.mxu0 %v220
    %228 = vmatpush.msra.mxu0 %v219
    %229 = vmatpush.msra.mxu0 %v218
    %230 = vmatpush.msra.mxu0 %v217
    %231 = vmatpush.msra.mxu0 %v216
    %232 = vmatpush.msra.mxu0 %v215
    %233 = vmatpush.msra.mxu0 %v214
    %234 = vmatpush.msra.mxu0 %v213
    %235 = vmatpush.msra.mxu0 %v212
    %236 = vmatpush.msra.mxu0 %v211
    %237 = vmatpush.msra.mxu0 %v210
    %238 = vmatpush.msra.mxu0 %v209
    %239 = vmatpush.msra.mxu0 %v208
    %240 = vmatmul.f32.gmra.mxu0 %v206
    %v241 = vpop.f32.mrf.mxu0
    %v242 = vadd.f32 0.0, %v241
    %243 = vmatmul.f32.gmra.mxu0 %v207
    %v244 = vpop.f32.mrf.mxu0
    %v245 = vadd.f32 0.0, %v244
    %246 = vdwg.mxu0
    %v247 = vadd.f32 %v155, %v242
    %v248 = vadd.f32 %v158, %v245
    %v249 = vmax.f32 %v247, 0.0
    %v250 = vmax.f32 %v248, 0.0
    %s251 = scalar_lea.vmem [#allocation7], 128
    %v252 = vld [vmem:[%s251] sm:$0xff]
    %v253 = vld [vmem:[%s251 + $0x8] sm:$0xff]
    %v254 = vld [vmem:[%s251 + $0x10] sm:$0xff]
    %v255 = vld [vmem:[%s251 + $0x18] sm:$0xff]
    %v256 = vld [vmem:[%s251 + $0x20] sm:$0xff]
    %v257 = vld [vmem:[%s251 + $0x28] sm:$0xff]
    %v258 = vld [vmem:[%s251 + $0x30] sm:$0xff]
    %v259 = vld [vmem:[%s251 + $0x38] sm:$0xff]
    %v260 = vld [vmem:[%s251 + $0x40] sm:$0xff]
    %v261 = vld [vmem:[%s251 + $0x48] sm:$0xff]
    %v262 = vld [vmem:[%s251 + $0x50] sm:$0xff]
    %v263 = vld [vmem:[%s251 + $0x58] sm:$0xff]
    %v264 = vld [vmem:[%s251 + $0x60] sm:$0xff]
    %v265 = vld [vmem:[%s251 + $0x68] sm:$0xff]
    %v266 = vld [vmem:[%s251 + $0x70] sm:$0xff]
    %v267 = vld [vmem:[%s251 + $0x78] sm:$0xff]
    %268 = vmatpush.msra.mxu0 %v267
    %269 = vmatpush.msra.mxu0 %v266
    %270 = vmatpush.msra.mxu0 %v265
    %271 = vmatpush.msra.mxu0 %v264
    %272 = vmatpush.msra.mxu0 %v263
    %273 = vmatpush.msra.mxu0 %v262
    %274 = vmatpush.msra.mxu0 %v261
    %275 = vmatpush.msra.mxu0 %v260
    %276 = vmatpush.msra.mxu0 %v259
    %277 = vmatpush.msra.mxu0 %v258
    %278 = vmatpush.msra.mxu0 %v257
    %279 = vmatpush.msra.mxu0 %v256
    %280 = vmatpush.msra.mxu0 %v255
    %281 = vmatpush.msra.mxu0 %v254
    %282 = vmatpush.msra.mxu0 %v253
    %283 = vmatpush.msra.mxu0 %v252
    %284 = vmatmul.f32.gmra.mxu0 %v249
    %v285 = vpop.f32.mrf.mxu0
    %v286 = vadd.f32 0.0, %v285
    %287 = vmatmul.f32.gmra.mxu0 %v250
    %v288 = vpop.f32.mrf.mxu0
    %v289 = vadd.f32 0.0, %v288
    %290 = vdwg.mxu0
    %v291 = vadd.f32 %v178, %v286
    %v292 = vadd.f32 %v181, %v289
    %v293 = vmax.f32 %v291, 0.0
    %v294 = vmax.f32 %v292, 0.0
    %s295 = scalar_lea.vmem [#allocation7], 256
    %v296 = vld [vmem:[%s295] sm:$0xff]
    %v297 = vld [vmem:[%s295 + $0x8] sm:$0xff]
    %v298 = vld [vmem:[%s295 + $0x10] sm:$0xff]
    %v299 = vld [vmem:[%s295 + $0x18] sm:$0xff]
    %v300 = vld [vmem:[%s295 + $0x20] sm:$0xff]
    %v301 = vld [vmem:[%s295 + $0x28] sm:$0xff]
    %v302 = vld [vmem:[%s295 + $0x30] sm:$0xff]
    %v303 = vld [vmem:[%s295 + $0x38] sm:$0xff]
    %v304 = vld [vmem:[%s295 + $0x40] sm:$0xff]
    %v305 = vld [vmem:[%s295 + $0x48] sm:$0xff]
    %v306 = vld [vmem:[%s295 + $0x50] sm:$0xff]
    %v307 = vld [vmem:[%s295 + $0x58] sm:$0xff]
    %v308 = vld [vmem:[%s295 + $0x60] sm:$0xff]
    %v309 = vld [vmem:[%s295 + $0x68] sm:$0xff]
    %v310 = vld [vmem:[%s295 + $0x70] sm:$0xff]
    %v311 = vld [vmem:[%s295 + $0x78] sm:$0xff]
    %312 = vmatpush.msra.mxu0 %v311
    %313 = vmatpush.msra.mxu0 %v310
    %314 = vmatpush.msra.mxu0 %v309
    %315 = vmatpush.msra.mxu0 %v308
    %316 = vmatpush.msra.mxu0 %v307
    %317 = vmatpush.msra.mxu0 %v306
    %318 = vmatpush.msra.mxu0 %v305
    %319 = vmatpush.msra.mxu0 %v304
    %320 = vmatpush.msra.mxu0 %v303
    %321 = vmatpush.msra.mxu0 %v302
    %322 = vmatpush.msra.mxu0 %v301
    %323 = vmatpush.msra.mxu0 %v300
    %324 = vmatpush.msra.mxu0 %v299
    %325 = vmatpush.msra.mxu0 %v298
    %326 = vmatpush.msra.mxu0 %v297
    %327 = vmatpush.msra.mxu0 %v296
    %328 = vmatmul.f32.gmra.mxu0 %v293
    %v329 = vpop.f32.mrf.mxu0
    %v330 = vadd.f32 0.0, %v329
    %331 = vmatmul.f32.gmra.mxu0 %v294
    %v332 = vpop.f32.mrf.mxu0
    %v333 = vadd.f32 0.0, %v332
    %334 = vdwg.mxu0
    %v335 = vadd.f32 %v201, %v330
    %v336 = vadd.f32 %v204, %v333
    %337 = vst [vmem:[#allocation10] sm:$0xff] %v335
    %338 = vst [vmem:[#allocation10 + $0x8] sm:$0xff] %v336
    // Predicated region
    $region34: #{tpu_custom_call.1} parent=1 // pred_check
      _
    $region35: #{tpu_custom_call.1} parent=1 // pred_check_branch
      %340 = sbr.rel (0) target = $region37
    $region36: #{tpu_custom_call.1} parent=1 // pred_region
      %342 = vsyncadd [#allocation4], 0
      %s343 = sshll.u32 [#allocation10], 4
      %s344 = int_to_ptr.vmem [resolvable:$true] %s343
      %s345 = sshll.u32 %s4, 4
      %s346 = int_to_ptr.hbm [resolvable:$true] %s345
      %351 = dma.vmem_to_hbm [thread:$0]  %s344, 256, %s346, [#allocation4], 128, 128, 8
    $region37: #{tpu_custom_call.1} parent=1 // pred_fallthru
      _
    // Predicated region
    $region38: #{tpu_custom_call.1} parent=1 // pred_check
      _
    $region39: #{tpu_custom_call.1} parent=1 // pred_check_branch
      %353 = sbr.rel (0) target = $region41
    $region40: #{tpu_custom_call.1} parent=1 // pred_region
      %355 = dma.done [#allocation4], 256
    $region41: #{tpu_custom_call.1} parent=1 // pred_fallthru
      _
    %356 = vsyncpa [#allocation3], 1
    %357 = vsyncpa [#allocation6], 1
    %358 = vsyncpa [#allocation9], 1
    %359 = vsyncpa [#allocation4], 1

</llo_original>
